<compile_context>
chip_gen: v5e
topology: v5e:2x2
jax: 0.10.0
libtpu: 0.0.40
codegen_flags: <defaults>
</compile_context>

<pallas_src>
import math
from functools import partial

import jax
import jax.numpy as jnp
from jax import lax
from jax.experimental import pallas as pl
from jax.experimental.pallas import tpu as pltpu


def _ceil_div(a, b):
    return -(-a // b)


def _sa_kernel(x_ref, w_ref, b_ref, bias_ref, o_ref, *,
               D, A, n_sb, valid_blocks, guard, compute_dtype):
    """One grid step over C = n_sb * A batch-packed lanes.

    x_ref   : [D, C]   lane-dense input slab (consecutive P-lane batch blocks)
    w_ref   : [3D, D]  fused (Wk ; Wq/sqrt(D) ; Wv)
    b_ref   : [3D, 1]  fused (bk ; bq/sqrt(D) ; bv)
    bias_ref: [A, A]   block-diagonal additive bias: pos_mat/sqrt(D) on the PxP
                       diagonal blocks, -1e30 elsewhere (kills cross-batch terms)
    o_ref   : [D, C]
    """
    x = x_ref[...]
    w = w_ref[...]

    # Fused QKV projection: one wide MXU matmul, f32 accumulation, one bias add.
    qkv = jnp.dot(w, x, preferred_element_type=jnp.float32) + b_ref[...]   # [3D, C]
    k = qkv[0 * D:1 * D, :]
    q = qkv[1 * D:2 * D, :]          # 1/sqrt(D) already folded into Wq / bq
    v = qkv[2 * D:3 * D, :]
    if compute_dtype != jnp.float32:
        k = k.astype(compute_dtype)
        q = q.astype(compute_dtype)
        v = v.astype(compute_dtype)

    bias = bias_ref[...]             # f32, stays f32 (mask constant must not narrow)
    pid = pl.program_id(0)

    # Attention is block-diagonal per batch -> only the diagonal [A, A] super-blocks
    # are computed (cost ~ C*A instead of C^2).  Static, unrolled loop.
    for a in range(n_sb):
        lo = a * A

        def _block(lo=lo):
            kb = k[:, lo:lo + A]
            qb = q[:, lo:lo + A]
            vb = v[:, lo:lo + A]
            # K^T Q without an explicit transpose: contract dim 0 of both operands.
            att = lax.dot_general(kb, qb,
                                  dimension_numbers=(((0,), (0,)), ((), ())),
                                  preferred_element_type=jnp.float32)      # [A, A]
            att = att + bias                                               # mask + pos
            # softmax over the key axis (axis 0) == torch Softmax(dim=1) on [N,P,P]
            m = jnp.max(att, axis=0, keepdims=True)
            e = jnp.exp(att - m)                                           # [A, A] f32
            denom = jnp.sum(e, axis=0, keepdims=True)                      # [1, A]
            if compute_dtype != jnp.float32:
                e = e.astype(compute_dtype)
            out = jnp.dot(vb, e, preferred_element_type=jnp.float32)       # [D, A]
            # Normalize AFTER the V matmul: [1,A] divide + [D,A] multiply
            # instead of an [A,A] multiply + extra [A,A] VMEM traffic.
            out = out * (1.0 / denom)
            o_ref[:, lo:lo + A] = out.astype(o_ref.dtype)

        if guard:
            # Skip super-blocks that are pure batch padding (their output lanes are
            # discarded by the wrapper anyway).
            pl.when(pid * n_sb + a < valid_blocks)(_block)
        else:
            _block()


def sa_forward(x, params, pos_mat=None, *, compute_dtype=jnp.float32,
               attn_block_lanes=256, max_lanes_per_step=1024):
    """Self-attention forward.

    x: [N, D, P].  params: wk/wq/wv [D, D], bk/bq/bv [D].
    pos_mat: optional shared positional bias of shape [P, P].
    compute_dtype: matmul-operand dtype (jnp.bfloat16 recommended on v6e/v7x;
                   accumulation and softmax math always stay f32).
    attn_block_lanes: attention super-block target (256 for v6e/v7x MXU, 128 for v5e).
    Returns [N, D, P] in x.dtype.
    """
    N, D, P = x.shape
    out_dtype = x.dtype
    inv_sqrt_d = 1.0 / math.sqrt(D)

    # ---- choose attention super-block A and per-step lane count C -----------------
    total = N * P
    if total <= 512:
        # Tiny problem: one grid step, blocks == full (possibly lane-unaligned)
        # arrays, a single attention super-block -> zero batch padding.
        A = C = total
        n_sb = 1
        n_steps = 1
        n_pad = N
    else:
        lane_unit = (128 // math.gcd(P, 128)) * P                  # lcm(P, 128)
        A = lane_unit * max(1, attn_block_lanes // lane_unit)      # ~256, P- & 128-aligned
        bpb = A // P                                               # batches per super-block
        blocks_total = _ceil_div(N, bpb)
        # Pack several super-blocks per grid step to amortize the ~0.35us step
        # overhead, but keep >= 2 grid steps when possible (v7x dual-TC sharding).
        sb_per_step = max(1, min(max_lanes_per_step // A,
                                 _ceil_div(blocks_total, 2)))
        n_steps = _ceil_div(blocks_total, sb_per_step)
        n_sb = sb_per_step
        C = n_sb * A
        n_pad = n_steps * n_sb * bpb
    valid_blocks = _ceil_div(N, A // P)
    guard = (n_steps * n_sb) > valid_blocks

    # ---- lane-dense input slab [D, n_pad*P] ----------------------------------------
    x_t = jnp.transpose(x, (1, 0, 2))                              # [D, N, P]
    if n_pad != N:
        x_t = jnp.pad(x_t, ((0, 0), (0, n_pad - N), (0, 0)))
    x_slab = x_t.reshape(D, n_pad * P).astype(compute_dtype)

    # ---- fused QKV weight / bias (1/sqrt(D) folded into the Q rows) ----------------
    w_qkv = jnp.concatenate([params["wk"],
                             params["wq"] * inv_sqrt_d,
                             params["wv"]], axis=0).astype(compute_dtype)   # [3D, D]
    b_qkv = jnp.concatenate([params["bk"],
                             params["bq"] * inv_sqrt_d,
                             params["bv"]], axis=0).astype(jnp.float32).reshape(3 * D, 1)

    # ---- [A, A] block-diagonal additive bias (mask + scaled pos), built once --------
    blk = jnp.arange(A, dtype=jnp.int32) // P
    same_block = blk[:, None] == blk[None, :]                                # [A, A]
    if pos_mat is not None:
        pos = jnp.asarray(pos_mat, jnp.float32).reshape(P, P) * inv_sqrt_d
        diag = jnp.tile(pos, (A // P, A // P))
    else:
        diag = jnp.zeros((A, A), jnp.float32)
    bias = jnp.where(same_block, diag, jnp.float32(-1e30))                   # [A, A] f32

    kernel = partial(_sa_kernel, D=D, A=A, n_sb=n_sb, valid_blocks=valid_blocks,
                     guard=guard, compute_dtype=compute_dtype)

    # NOTE: w_qkv / b_qkv / bias have constant index_maps, so Pallas fetches them once;
    # their VMEM footprint is tiny ([3D,D] + [A,A] f32), so default buffering is fine.
    grid_spec = pltpu.PrefetchScalarGridSpec(
        num_scalar_prefetch=0,
        grid=(n_steps,),
        in_specs=[
            pl.BlockSpec((D, C), lambda n: (0, n)),          # x slab (lane-dense)
            pl.BlockSpec((3 * D, D), lambda n: (0, 0)),      # fused W (grid-invariant)
            pl.BlockSpec((3 * D, 1), lambda n: (0, 0)),      # fused bias
            pl.BlockSpec((A, A), lambda n: (0, 0)),          # [A,A] mask/pos bias
        ],
        out_specs=pl.BlockSpec((D, C), lambda n: (0, n)),    # lane-dense output slab
    )

    out_slab = pl.pallas_call(
        kernel,
        out_shape=jax.ShapeDtypeStruct((D, n_pad * P), out_dtype),
        grid_spec=grid_spec,
        compiler_params=pltpu.CompilerParams(
            dimension_semantics=("parallel",),
        ),
    )(x_slab, w_qkv, b_qkv, bias)

    out = out_slab.reshape(D, n_pad, P)[:, :N, :]             # [D, N, P]
    return jnp.transpose(out, (1, 0, 2)).astype(out_dtype)    # [N, D, P]


def sa_reference(x, params, pos_mat=None):
    """Pure-JAX reference mirroring the PyTorch forward exactly."""
    D = x.shape[1]
    hp = jax.lax.Precision.HIGHEST
    k = jnp.einsum("oc,ncp->nop", params["wk"], x, precision=hp) + params["bk"][None, :, None]
    q = jnp.einsum("oc,ncp->nop", params["wq"], x, precision=hp) + params["bq"][None, :, None]
    v = jnp.einsum("oc,ncp->nop", params["wv"], x, precision=hp) + params["bv"][None, :, None]
    kt = jnp.swapaxes(k, 1, 2)                                   # [N, P, D]
    att = jnp.einsum("npd,ndq->npq", kt, q, precision=hp)        # [N, P, P]
    if pos_mat is not None:
        att = att + pos_mat
    att = att / jnp.sqrt(jnp.float32(D))
    wmap = jax.nn.softmax(att, axis=1)                           # softmax over dim=1 (keys)
    return jnp.einsum("ndp,npq->ndq", v, wmap, precision=hp)


if __name__ == "__main__":
    D, P = 32, 16   # vec_dim, patch_num

    key = jax.random.PRNGKey(0)
    kx, kwk, kwq, kwv, kbk, kbq, kbv, kpos, kx2 = jax.random.split(key, 9)

    params = {
        "wk": 0.1 * jax.random.normal(kwk, (D, D), jnp.float32),
        "wq": 0.1 * jax.random.normal(kwq, (D, D), jnp.float32),
        "wv": 0.1 * jax.random.normal(kwv, (D, D), jnp.float32),
        "bk": 0.1 * jax.random.normal(kbk, (D,), jnp.float32),
        "bq": 0.1 * jax.random.normal(kbq, (D,), jnp.float32),
        "bv": 0.1 * jax.random.normal(kbv, (D,), jnp.float32),
    }
    pos = 0.5 * jax.random.normal(kpos, (P, P), jnp.float32)

    # --- small batch (single-step tiny path, no padding) ---------------------------
    N = 2
    x = jax.random.normal(kx, (N, D, P), jnp.float32)

    out = jax.block_until_ready(sa_forward(x, params, pos_mat=None))
    ref = sa_reference(x, params, pos_mat=None)
    assert out.shape == (N, D, P)
    assert jnp.allclose(out, ref, atol=1e-2, rtol=1e-2), "Pallas mismatch (f32, no pos)"

    out_p = jax.block_until_ready(sa_forward(x, params, pos_mat=pos))
    ref_p = sa_reference(x, params, pos_mat=pos)
    assert jnp.allclose(out_p, ref_p, atol=1e-2, rtol=1e-2), "Pallas mismatch (f32, pos)"

    # --- larger batch: exercises the lane-aligned multi-super-block / multi-step
    #     path including the padded-super-block pl.when guard ------------------------
    N2 = 40
    x2 = jax.random.normal(kx2, (N2, D, P), jnp.float32)
    out2 = jax.block_until_ready(sa_forward(x2, params, pos_mat=pos))
    ref2 = sa_reference(x2, params, pos_mat=pos)
    assert out2.shape == (N2, D, P)
    assert jnp.allclose(out2, ref2, atol=1e-2, rtol=1e-2), "Pallas mismatch (f32, large N)"

    # --- bf16 matmul operands, f32 accumulation (v6e/v7x MXU fast path) -------------
    out_b = jax.block_until_ready(
        sa_forward(x2, params, pos_mat=pos, compute_dtype=jnp.bfloat16))
    assert jnp.allclose(out_b, ref2, atol=5e-2, rtol=5e-2), "Pallas mismatch (bf16)"

    print("KERNEL_OK")
</pallas_src>

<mosaic_0001>
module attributes {stable_mosaic.version = 11 : i64} {
  func.func @_sa_kernel(%arg0: i32, %arg1: memref<32x32xf32, #tpu.memory_space<vmem>>, %arg2: memref<96x32xf32, #tpu.memory_space<vmem>>, %arg3: memref<96x1xf32, #tpu.memory_space<vmem>>, %arg4: memref<32x32xf32, #tpu.memory_space<vmem>>, %arg5: memref<32x32xf32, #tpu.memory_space<vmem>>) attributes {dimension_semantics = [#tpu.dimension_semantics<parallel>], iteration_bounds = array<i64: 1>, scalar_prefetch = 0 : i64, scratch_operands = 0 : i64, tpu.core_type = #tpu.core_type<tc>, window_params = [{transform_indices = @transform_0, window_bounds = array<i64: 32, 32>}, {pipeline_mode = #tpu.pipeline_mode<synchronous>, transform_indices = @transform_1, window_bounds = array<i64: 96, 32>}, {pipeline_mode = #tpu.pipeline_mode<synchronous>, transform_indices = @transform_2, window_bounds = array<i64: 96, 1>}, {pipeline_mode = #tpu.pipeline_mode<synchronous>, transform_indices = @transform_3, window_bounds = array<i64: 32, 32>}, {transform_indices = @transform_4, window_bounds = array<i64: 32, 32>}]} {
    %c0 = arith.constant 0 : index
    %c0_0 = arith.constant 0 : index
    %0 = vector.load %arg1[%c0, %c0_0] : memref<32x32xf32, #tpu.memory_space<vmem>>, vector<32x32xf32>
    %c0_1 = arith.constant 0 : index
    %c0_2 = arith.constant 0 : index
    %1 = vector.load %arg2[%c0_1, %c0_2] : memref<96x32xf32, #tpu.memory_space<vmem>>, vector<96x32xf32>
    %cst = arith.constant dense<0.000000e+00> : vector<96x32xf32>
    %2 = tpu.matmul %1, %0, %cst {dimension_numbers = #tpu.dot_dimension_numbers<[1], [0], [0], [1], [0, 0, 1, 1], [], []>} : vector<96x32xf32>, vector<32x32xf32>, vector<96x32xf32> -> vector<96x32xf32>
    %c0_3 = arith.constant 0 : index
    %c0_4 = arith.constant 0 : index
    %3 = vector.load %arg3[%c0_3, %c0_4] : memref<96x1xf32, #tpu.memory_space<vmem>>, vector<96x1xf32>
    %4 = vector.broadcast %3 : vector<96x1xf32> to vector<96x32xf32>
    %5 = arith.addf %2, %4 : vector<96x32xf32>
    %6 = vector.extract_strided_slice %5 {offsets = [0, 0], sizes = [32, 32], strides = [1, 1]} : vector<96x32xf32> to vector<32x32xf32>
    %7 = vector.extract_strided_slice %5 {offsets = [32, 0], sizes = [32, 32], strides = [1, 1]} : vector<96x32xf32> to vector<32x32xf32>
    %8 = vector.extract_strided_slice %5 {offsets = [64, 0], sizes = [32, 32], strides = [1, 1]} : vector<96x32xf32> to vector<32x32xf32>
    %c0_5 = arith.constant 0 : index
    %c0_6 = arith.constant 0 : index
    %9 = vector.load %arg4[%c0_5, %c0_6] : memref<32x32xf32, #tpu.memory_space<vmem>>, vector<32x32xf32>
    %cst_7 = arith.constant dense<0.000000e+00> : vector<32x32xf32>
    %10 = tpu.matmul %6, %7, %cst_7 {dimension_numbers = #tpu.dot_dimension_numbers<[0], [0], [1], [1], [0, 1, 1, 1], [], []>} : vector<32x32xf32>, vector<32x32xf32>, vector<32x32xf32> -> vector<32x32xf32>
    %11 = arith.addf %10, %9 : vector<32x32xf32>
    %cst_8 = arith.constant dense<0xFF800000> : vector<32xf32>
    %12 = vector.multi_reduction <maximumf>, %11, %cst_8 [0] : vector<32x32xf32> to vector<32xf32>
    %13 = vector.shape_cast %12 : vector<32xf32> to vector<1x32xf32>
    %14 = vector.broadcast %13 : vector<1x32xf32> to vector<32x32xf32>
    %15 = arith.subf %11, %14 : vector<32x32xf32>
    %16 = math.exp %15 : vector<32x32xf32>
    %cst_9 = arith.constant dense<0.000000e+00> : vector<32xf32>
    %17 = vector.multi_reduction <add>, %16, %cst_9 [0] : vector<32x32xf32> to vector<32xf32>
    %18 = vector.shape_cast %17 : vector<32xf32> to vector<1x32xf32>
    %cst_10 = arith.constant dense<0.000000e+00> : vector<32x32xf32>
    %19 = tpu.matmul %8, %16, %cst_10 {dimension_numbers = #tpu.dot_dimension_numbers<[1], [0], [0], [1], [0, 0, 1, 1], [], []>} : vector<32x32xf32>, vector<32x32xf32>, vector<32x32xf32> -> vector<32x32xf32>
    %cst_11 = arith.constant 1.000000e+00 : f32
    %20 = vector.broadcast %cst_11 : f32 to vector<1x32xf32>
    %21 = arith.divf %20, %18 : vector<1x32xf32>
    %22 = vector.broadcast %21 : vector<1x32xf32> to vector<32x32xf32>
    %23 = arith.mulf %19, %22 : vector<32x32xf32>
    %c0_12 = arith.constant 0 : index
    %c0_13 = arith.constant 0 : index
    %24 = vector.load %arg5[%c0_12, %c0_13] : memref<32x32xf32, #tpu.memory_space<vmem>>, vector<32x32xf32>
    tpu.vector_store %arg5[%c0_12, %c0_13], %23 {strides = array<i32>} : memref<32x32xf32, #tpu.memory_space<vmem>>, vector<32x32xf32>,
    return
  }
  func.func @transform_0(%arg0: i32) -> (i32, i32) {
    %c0_i32 = arith.constant 0 : i32
    %c0_i32_0 = arith.constant 0 : i32
    return %c0_i32, %arg0 : i32, i32
  }
  func.func @transform_1(%arg0: i32) -> (i32, i32) {
    %c0_i32 = arith.constant 0 : i32
    %c0_i32_0 = arith.constant 0 : i32
    %c0_i32_1 = arith.constant 0 : i32
    return %c0_i32, %c0_i32_0 : i32, i32
  }
  func.func @transform_2(%arg0: i32) -> (i32, i32) {
    %c0_i32 = arith.constant 0 : i32
    %c0_i32_0 = arith.constant 0 : i32
    %c0_i32_1 = arith.constant 0 : i32
    return %c0_i32, %c0_i32_0 : i32, i32
  }
  func.func @transform_3(%arg0: i32) -> (i32, i32) {
    %c0_i32 = arith.constant 0 : i32
    %c0_i32_0 = arith.constant 0 : i32
    %c0_i32_1 = arith.constant 0 : i32
    return %c0_i32, %c0_i32_0 : i32, i32
  }
  func.func @transform_4(%arg0: i32) -> (i32, i32) {
    %c0_i32 = arith.constant 0 : i32
    %c0_i32_0 = arith.constant 0 : i32
    return %c0_i32, %arg0 : i32, i32
  }
}

</mosaic_0001>

<llo_original>
// kernel: tpu_custom_call.1
$region0: #{tpu_custom_call.1}
  #allocation0 [shape = 'u32[]', space=smem, size = 0x4, offset = 0x4, fixed_abs, tag = 'smem constant byte address 0x4 - core index']
  #allocation1 [shape = 'u32[72,128]{1,0:T(1,128)}', space=vmem, size = 0x9000, scoped, tag = 'internal scratch']
  %s0 = inlined_call_operand.vmem [shape: f32[32,32], index: 0, kind: input, shape index: {}]
  %s1 = inlined_call_operand.vmem [shape: f32[96,32], index: 1, kind: input, shape index: {}]
  %s2 = inlined_call_operand.vmem [shape: f32[96,1], index: 2, kind: input, shape index: {}]
  %s3 = inlined_call_operand.vmem [shape: f32[32,32], index: 3, kind: input, shape index: {}]
  %s4 = inlined_call_operand.hbm [shape: f32[32,32], index: 4, kind: output, shape index: {}]
  %s5 = sld [smem:[#allocation0]]
  $region26: #{tpu_custom_call.1} parent=0
    _
  %s7 = ssub.s32 1, %s5
  %s8 = scalar_select 0, %s7, %s5
  $region1: #{tpu_custom_call.1} parent=0
    #allocation2 [shape = 'u8[16384]{0}', space=vmem, size = 0x4000, scoped, tag = 'output window, operand 0, single buffered']
    #allocation3 [shape = 's32[1]{0}', space=sflag, size = 0x4, scoped, tag = 'scoped memory for tpu_custom_call.1']
    %9 = vsyncpa [#allocation3], 0
    // Predicated region
    $region2: #{tpu_custom_call.1} parent=1 // pred_check
      _
    $region3: #{tpu_custom_call.1} parent=1 // pred_check_branch
      %11 = sbr.rel (0) target = $region5
    $region4: #{tpu_custom_call.1} parent=1 // pred_region
      _
    $region5: #{tpu_custom_call.1} parent=1 // pred_fallthru
      _
    // Predicated region
    $region6: #{tpu_custom_call.1} parent=1 // pred_check
      _
    $region7: #{tpu_custom_call.1} parent=1 // pred_check_branch
      %13 = sbr.rel (0) target = $region9
    $region8: #{tpu_custom_call.1} parent=1 // pred_region
      _
    $region9: #{tpu_custom_call.1} parent=1 // pred_fallthru
      _
    // Predicated region
    $region10: #{tpu_custom_call.1} parent=1 // pred_check
      _
    $region11: #{tpu_custom_call.1} parent=1 // pred_check_branch
      %15 = sbr.rel (0) target = $region13
    $region12: #{tpu_custom_call.1} parent=1 // pred_region
      _
    $region13: #{tpu_custom_call.1} parent=1 // pred_fallthru
      _
    // Predicated region
    $region14: #{tpu_custom_call.1} parent=1 // pred_check
      _
    $region15: #{tpu_custom_call.1} parent=1 // pred_check_branch
      %17 = sbr.rel (0) target = $region17
    $region16: #{tpu_custom_call.1} parent=1 // pred_region
      _
    $region17: #{tpu_custom_call.1} parent=1 // pred_fallthru
      _
    %v18 = vld [vmem:[%s0] sm:$0xff]
    %v19 = vld [vmem:[%s0 + $0x8] sm:$0xff]
    %v20 = vld [vmem:[%s0 + $0x10] sm:$0xff]
    %v21 = vld [vmem:[%s0 + $0x18] sm:$0xff]
    %v22 = vld [vmem:[%s1] sm:$0xff]
    %v23 = vld [vmem:[%s1 + $0x8] sm:$0xff]
    %v24 = vld [vmem:[%s1 + $0x10] sm:$0xff]
    %v25 = vld [vmem:[%s1 + $0x18] sm:$0xff]
    %v26 = vld [vmem:[%s1 + $0x20] sm:$0xff]
    %v27 = vld [vmem:[%s1 + $0x28] sm:$0xff]
    %v28 = vld [vmem:[%s1 + $0x30] sm:$0xff]
    %v29 = vld [vmem:[%s1 + $0x38] sm:$0xff]
    %v30 = vld [vmem:[%s1 + $0x40] sm:$0xff]
    %v31 = vld [vmem:[%s1 + $0x48] sm:$0xff]
    %v32 = vld [vmem:[%s1 + $0x50] sm:$0xff]
    %v33 = vld [vmem:[%s1 + $0x58] sm:$0xff]
    %v34 = vld [vmem:[%s2] sm:$0xff]
    %v35 = vld [vmem:[%s2 + $0x8] sm:$0xff]
    %v36 = vld [vmem:[%s2 + $0x10] sm:$0xff]
    %v37 = vld [vmem:[%s2 + $0x18] sm:$0xff]
    %v38 = vld [vmem:[%s2 + $0x20] sm:$0xff]
    %v39 = vld [vmem:[%s2 + $0x28] sm:$0xff]
    %v40 = vld [vmem:[%s2 + $0x30] sm:$0xff]
    %v41 = vld [vmem:[%s2 + $0x38] sm:$0xff]
    %v42 = vld [vmem:[%s2 + $0x40] sm:$0xff]
    %v43 = vld [vmem:[%s2 + $0x48] sm:$0xff]
    %v44 = vld [vmem:[%s2 + $0x50] sm:$0xff]
    %v45 = vld [vmem:[%s2 + $0x58] sm:$0xff]
    %47 = vset.pattern.permute.xlu0 0
    %48 = vperm.xlu0 %47, %v34
    %v49 = vpop.permute.xlu0 %48
    %52 = vset.pattern.permute.xlu0 0
    %53 = vperm.xlu0 %52, %v35
    %v54 = vpop.permute.xlu0 %53
    %57 = vset.pattern.permute.xlu0 0
    %58 = vperm.xlu0 %57, %v36
    %v59 = vpop.permute.xlu0 %58
    %62 = vset.pattern.permute.xlu0 0
    %63 = vperm.xlu0 %62, %v37
    %v64 = vpop.permute.xlu0 %63
    %67 = vset.pattern.permute.xlu0 0
    %68 = vperm.xlu0 %67, %v38
    %v69 = vpop.permute.xlu0 %68
    %72 = vset.pattern.permute.xlu0 0
    %73 = vperm.xlu0 %72, %v39
    %v74 = vpop.permute.xlu0 %73
    %77 = vset.pattern.permute.xlu0 0
    %78 = vperm.xlu0 %77, %v40
    %v79 = vpop.permute.xlu0 %78
    %82 = vset.pattern.permute.xlu0 0
    %83 = vperm.xlu0 %82, %v41
    %v84 = vpop.permute.xlu0 %83
    %87 = vset.pattern.permute.xlu0 0
    %88 = vperm.xlu0 %87, %v42
    %v89 = vpop.permute.xlu0 %88
    %92 = vset.pattern.permute.xlu0 0
    %93 = vperm.xlu0 %92, %v43
    %v94 = vpop.permute.xlu0 %93
    %97 = vset.pattern.permute.xlu0 0
    %98 = vperm.xlu0 %97, %v44
    %v99 = vpop.permute.xlu0 %98
    %102 = vset.pattern.permute.xlu0 0
    %103 = vperm.xlu0 %102, %v45
    %v104 = vpop.permute.xlu0 %103
    %vm106 = vcmask 261120
    %v108 = vsel %vm106, %v22, 0
    %v111 = vsel %vm106, %v23, 0
    %v114 = vsel %vm106, %v24, 0
    %v117 = vsel %vm106, %v25, 0
    %v120 = vsel %vm106, %v26, 0
    %v123 = vsel %vm106, %v27, 0
    %v126 = vsel %vm106, %v28, 0
    %v129 = vsel %vm106, %v29, 0
    %v132 = vsel %vm106, %v30, 0
    %v135 = vsel %vm106, %v31, 0
    %v138 = vsel %vm106, %v32, 0
    %v141 = vsel %vm106, %v33, 0
    %143 = vmatpush.msra.mxu0 0.0
    %144 = vmatpush.msra.mxu0 0.0
    %145 = vmatpush.msra.mxu0 0.0
    %146 = vmatpush.msra.mxu0 0.0
    %147 = vmatpush.msra.mxu0 0.0
    %148 = vmatpush.msra.mxu0 0.0
    %149 = vmatpush.msra.mxu0 0.0
    %150 = vmatpush.msra.mxu0 0.0
    %151 = vmatpush.msra.mxu0 0.0
    %152 = vmatpush.msra.mxu0 0.0
    %153 = vmatpush.msra.mxu0 0.0
    %154 = vmatpush.msra.mxu0 0.0
    %155 = vmatpush.msra.mxu0 %v21
    %156 = vmatpush.msra.mxu0 %v20
    %157 = vmatpush.msra.mxu0 %v19
    %158 = vmatpush.msra.mxu0 %v18
    %159 = vmatmul.f32.gmra.mxu0 %v108
    %v160 = vpop.f32.mrf.mxu0
    %v161 = vadd.f32 %v49, %v160
    %162 = vmatmul.f32.gmra.mxu0 %v111
    %v163 = vpop.f32.mrf.mxu0
    %v164 = vadd.f32 %v54, %v163
    %165 = vmatmul.f32.gmra.mxu0 %v114
    %v166 = vpop.f32.mrf.mxu0
    %v167 = vadd.f32 %v59, %v166
    %168 = vmatmul.f32.gmra.mxu0 %v117
    %v169 = vpop.f32.mrf.mxu0
    %v170 = vadd.f32 %v64, %v169
    %171 = vmatmul.f32.gmra.mxu0 %v120
    %v172 = vpop.f32.mrf.mxu0
    %v173 = vadd.f32 %v69, %v172
    %174 = vmatmul.f32.gmra.mxu0 %v123
    %v175 = vpop.f32.mrf.mxu0
    %v176 = vadd.f32 %v74, %v175
    %177 = vmatmul.f32.gmra.mxu0 %v126
    %v178 = vpop.f32.mrf.mxu0
    %v179 = vadd.f32 %v79, %v178
    %180 = vmatmul.f32.gmra.mxu0 %v129
    %v181 = vpop.f32.mrf.mxu0
    %v182 = vadd.f32 %v84, %v181
    %183 = vmatmul.f32.gmra.mxu0 %v132
    %v184 = vpop.f32.mrf.mxu0
    %v185 = vadd.f32 %v89, %v184
    %186 = vmatmul.f32.gmra.mxu0 %v135
    %v187 = vpop.f32.mrf.mxu0
    %v188 = vadd.f32 %v94, %v187
    %189 = vmatmul.f32.gmra.mxu0 %v138
    %v190 = vpop.f32.mrf.mxu0
    %v191 = vadd.f32 %v99, %v190
    %192 = vmatmul.f32.gmra.mxu0 %v141
    %v193 = vpop.f32.mrf.mxu0
    %v194 = vadd.f32 %v104, %v193
    %195 = vdwg.mxu0
    %v196 = vld [vmem:[%s3] sm:$0xff]
    %v197 = vld [vmem:[%s3 + $0x8] sm:$0xff]
    %v198 = vld [vmem:[%s3 + $0x10] sm:$0xff]
    %v199 = vld [vmem:[%s3 + $0x18] sm:$0xff]
    %200 = vxpose.xlu0.b32.start [1/16] %v161, 128
    %201 = vxpose.xlu0.b32.cont [2/16] %v164, 128
    %202 = vxpose.xlu0.b32.cont [3/16] %v167, 128
    %203 = vxpose.xlu0.b32.cont [4/16] %v170, 128
    %204 = vxpose.xlu0.b32.cont [5/16] 0.0, 128
    %205 = vxpose.xlu0.b32.cont [6/16] 0.0, 128
    %206 = vxpose.xlu0.b32.cont [7/16] 0.0, 128
    %207 = vxpose.xlu0.b32.cont [8/16] 0.0, 128
    %208 = vxpose.xlu0.b32.cont [9/16] 0.0, 128
    %209 = vxpose.xlu0.b32.cont [10/16] 0.0, 128
    %210 = vxpose.xlu0.b32.cont [11/16] 0.0, 128
    %211 = vxpose.xlu0.b32.cont [12/16] 0.0, 128
    %212 = vxpose.xlu0.b32.cont [13/16] 0.0, 128
    %213 = vxpose.xlu0.b32.cont [14/16] 0.0, 128
    %214 = vxpose.xlu0.b32.cont [15/16] 0.0, 128
    %215 = vxpose.xlu0.b32.end [16/16] 0.0, 128
    %v216 = vpop.trf.xlu0
    %v217 = vpop.trf.xlu0
    %v218 = vpop.trf.xlu0
    %v219 = vpop.trf.xlu0
    %v220 = vpop.trf.xlu0
    %v221 = vpop.trf.xlu0
    %v222 = vpop.trf.xlu0
    %v223 = vpop.trf.xlu0
    %v224 = vpop.trf.xlu0
    %v225 = vpop.trf.xlu0
    %v226 = vpop.trf.xlu0
    %v227 = vpop.trf.xlu0
    %v228 = vpop.trf.xlu0
    %v229 = vpop.trf.xlu0
    %v230 = vpop.trf.xlu0
    %v231 = vpop.trf.xlu0
    %v233 = vsel %vm106, %v216, 0
    %v236 = vsel %vm106, %v217, 0
    %v239 = vsel %vm106, %v218, 0
    %v242 = vsel %vm106, %v219, 0
    %244 = vmatpush.msra.mxu0 0.0
    %245 = vmatpush.msra.mxu0 0.0
    %246 = vmatpush.msra.mxu0 0.0
    %247 = vmatpush.msra.mxu0 0.0
    %248 = vmatpush.msra.mxu0 0.0
    %249 = vmatpush.msra.mxu0 0.0
    %250 = vmatpush.msra.mxu0 0.0
    %251 = vmatpush.msra.mxu0 0.0
    %252 = vmatpush.msra.mxu0 0.0
    %253 = vmatpush.msra.mxu0 0.0
    %254 = vmatpush.msra.mxu0 0.0
    %255 = vmatpush.msra.mxu0 0.0
    %256 = vmatpush.msra.mxu0 %v182
    %257 = vmatpush.msra.mxu0 %v179
    %258 = vmatpush.msra.mxu0 %v176
    %259 = vmatpush.msra.mxu0 %v173
    %260 = vmatmul.f32.gmra.mxu0 %v233
    %v261 = vpop.f32.mrf.mxu0
    %v262 = vadd.f32 %v196, %v261
    %263 = vmatmul.f32.gmra.mxu0 %v236
    %v264 = vpop.f32.mrf.mxu0
    %v265 = vadd.f32 %v197, %v264
    %266 = vmatmul.f32.gmra.mxu0 %v239
    %v267 = vpop.f32.mrf.mxu0
    %v268 = vadd.f32 %v198, %v267
    %269 = vmatmul.f32.gmra.mxu0 %v242
    %v270 = vpop.f32.mrf.mxu0
    %v271 = vadd.f32 %v199, %v270
    %272 = vdwg.mxu0
    %v273 = vsel %vm106, %v262, -inf
    %v274 = vsel %vm106, %v265, -inf
    %v275 = vsel %vm106, %v268, -inf
    %v276 = vsel %vm106, %v271, -inf
    %v277 = vmax.f32 %v273, %v274
    %v278 = vmax.f32 %v275, %v276
    %v279 = vmax.f32 %v277, %v278
    %v280 = vrot.slane %v279, 4
    %v281 = vmax.f32 %v279, %v280
    %v282 = vrot.slane %v281, 2
    %v283 = vmax.f32 %v281, %v282
    %v284 = vrot.slane %v283, 1
    %v285 = vmax.f32 %v283, %v284
    %v286 = vsub.f32 %v262, %v285
    %v287 = vsub.f32 %v265, %v285
    %v288 = vsub.f32 %v268, %v285
    %v289 = vsub.f32 %v271, %v285
    %v290 = vmul.f32 %v286, 1.442695
    %v291 = vpow.pop %v290
    %v292 = vmul.f32 %v287, 1.442695
    %v293 = vpow.pop %v292
    %v294 = vmul.f32 %v288, 1.442695
    %v295 = vpow.pop %v294
    %v296 = vmul.f32 %v289, 1.442695
    %v297 = vpow.pop %v296
    %v298 = vsel %vm106, %v291, 0.0
    %v299 = vsel %vm106, %v293, 0.0
    %v300 = vadd.f32 %v298, %v299
    %v301 = vsel %vm106, %v295, 0.0
    %v302 = vadd.f32 %v300, %v301
    %v303 = vsel %vm106, %v297, 0.0
    %v304 = vadd.f32 %v302, %v303
    %v305 = vrot.slane %v304, 4
    %v306 = vadd.f32 %v304, %v305
    %v307 = vrot.slane %v306, 2
    %v308 = vadd.f32 %v306, %v307
    %v309 = vrot.slane %v308, 1
    %v310 = vadd.f32 %v308, %v309
    %v312 = vsel %vm106, %v185, 0
    %v315 = vsel %vm106, %v188, 0
    %v318 = vsel %vm106, %v191, 0
    %v321 = vsel %vm106, %v194, 0
    %323 = vmatpush.msra.mxu0 0.0
    %324 = vmatpush.msra.mxu0 0.0
    %325 = vmatpush.msra.mxu0 0.0
    %326 = vmatpush.msra.mxu0 0.0
    %327 = vmatpush.msra.mxu0 0.0
    %328 = vmatpush.msra.mxu0 0.0
    %329 = vmatpush.msra.mxu0 0.0
    %330 = vmatpush.msra.mxu0 0.0
    %331 = vmatpush.msra.mxu0 0.0
    %332 = vmatpush.msra.mxu0 0.0
    %333 = vmatpush.msra.mxu0 0.0
    %334 = vmatpush.msra.mxu0 0.0
    %335 = vmatpush.msra.mxu0 %v297
    %336 = vmatpush.msra.mxu0 %v295
    %337 = vmatpush.msra.mxu0 %v293
    %338 = vmatpush.msra.mxu0 %v291
    %339 = vmatmul.f32.gmra.mxu0 %v312
    %v340 = vpop.f32.mrf.mxu0
    %v341 = vadd.f32 0.0, %v340
    %342 = vmatmul.f32.gmra.mxu0 %v315
    %v343 = vpop.f32.mrf.mxu0
    %v344 = vadd.f32 0.0, %v343
    %345 = vmatmul.f32.gmra.mxu0 %v318
    %v346 = vpop.f32.mrf.mxu0
    %v347 = vadd.f32 0.0, %v346
    %348 = vmatmul.f32.gmra.mxu0 %v321
    %v349 = vpop.f32.mrf.mxu0
    %v350 = vadd.f32 0.0, %v349
    %351 = vdwg.mxu0
    %v352 = vrcp.pop %v310
    %v353 = vmul.f32 %v310, %v352
    %v354 = vsub.f32 1.0, %v353
    %v355 = vmul.f32 %v352, %v354
    %v356 = vadd.f32 %v352, %v355
    %vm357 = vweird.f32 %v310
    %vm358 = vweird.f32 %v352
    %vm359 = vmor %vm357, %vm358
    %v360 = vsel %vm359, %v352, %v356
    %v361 = vand.u32 2147483647, %v310
    %vm362 = vcmp.eq.f32.partialorder %v361, 8.507059e+37
    %v363 = vand.u32 %v310, 2147483648
    %v364 = vor.u32 1.1754944e-38, %v363
    %v365 = vsel %vm362, %v364, %v360
    %v366 = vmul.f32 1.0, %v365
    %v367 = vmul.f32 %v341, %v366
    %v368 = vmul.f32 %v344, %v366
    %v369 = vmul.f32 %v347, %v366
    %v370 = vmul.f32 %v350, %v366
    %371 = vst.msk [vmem:[#allocation2] sm:$0xff] %vm106, %v367
    %372 = vst.msk [vmem:[#allocation2 + $0x8] sm:$0xff] %vm106, %v368
    %373 = vst.msk [vmem:[#allocation2 + $0x10] sm:$0xff] %vm106, %v369
    %374 = vst.msk [vmem:[#allocation2 + $0x18] sm:$0xff] %vm106, %v370
    // Predicated region
    $region18: #{tpu_custom_call.1} parent=1 // pred_check
      _
    $region19: #{tpu_custom_call.1} parent=1 // pred_check_branch
      %376 = sbr.rel (0) target = $region21
    $region20: #{tpu_custom_call.1} parent=1 // pred_region
      %378 = vsyncadd [#allocation3], 0
      %s379 = sshll.u32 [#allocation2], 4
      %s380 = int_to_ptr.vmem [resolvable:$true] %s379
      %s381 = sshll.u32 %s4, 4
      %s382 = int_to_ptr.hbm [resolvable:$true] %s381
      %387 = dma.vmem_to_hbm [thread:$0]  %s380, 512, %s382, [#allocation3], 128, 128, 8
    $region21: #{tpu_custom_call.1} parent=1 // pred_fallthru
      _
    // Predicated region
    $region22: #{tpu_custom_call.1} parent=1 // pred_check
      _
    $region23: #{tpu_custom_call.1} parent=1 // pred_check_branch
      %389 = sbr.rel (0) target = $region25
    $region24: #{tpu_custom_call.1} parent=1 // pred_region
      %391 = dma.done [#allocation3], 512
    $region25: #{tpu_custom_call.1} parent=1 // pred_fallthru
      _
    %392 = vsyncpa [#allocation3], 1

</llo_original>
